<compile_context>
chip_gen: v7x
topology: tpu7x:2x2x1
jax: 0.10.0
libtpu: 0.0.40
codegen_flags: <defaults>
</compile_context>

<pallas_src>
import functools

import jax
import jax.numpy as jnp
from jax import lax
from jax.experimental import pallas as pl
from jax.experimental.pallas import tpu as pltpu

EPS = 1e-5


# ---------------------------------------------------------------------------
# Fused kernel: whole Bottleneck block for one batch element per grid step
# ---------------------------------------------------------------------------
def _bottleneck_kernel(x_ref, w1_ref, w2_ref, w3_ref, bn1_ref, bn2_ref, bn3_ref,
                       o_ref, pad_ref, *, H, W):
    """x_ref: (1,H,W,Cin) f32; w1:(Cin,P) bf16; w2:(3,3P,P) bf16 (ky, kx*cin, cout);
    w3:(P,Cout) bf16; bn*: (2,C) f32 [scale; shift]; o_ref:(1,H,W,Cout);
    pad_ref: (H+2, W+2, P) f32 VMEM scratch (zero-padded stage-1 output)."""
    cin = x_ref.shape[-1]
    planes = w1_ref.shape[-1]
    cout = w3_ref.shape[-1]

    x = x_ref[...].reshape(H * W, cin)                       # f32 residual copy

    # ---- stage 1: 1x1 conv (per-voxel matmul) + folded-BN + ReLU ----
    y1 = jnp.dot(x.astype(jnp.bfloat16), w1_ref[...],
                 preferred_element_type=jnp.float32)
    out1 = jnp.maximum(y1 * bn1_ref[0:1, :] + bn1_ref[1:2, :], 0.0)

    # ---- stage 2: 3x3 conv (SAME, stride 1, dil 1) + folded-BN + ReLU ----
    # halo handled in-kernel: zero-init scratch, write interior, then
    # im2col along W -> 3 matmuls with K = 3 * planes.
    pad_ref[...] = jnp.zeros_like(pad_ref)
    pad_ref[1:H + 1, 1:W + 1, :] = out1.reshape(H, W, planes)
    padded = pad_ref[...]                                    # (H+2, W+2, P)
    acc = jnp.zeros((H * W, planes), jnp.float32)
    for ky in range(3):
        patch = jnp.concatenate(
            [padded[ky:ky + H, kx:kx + W, :] for kx in range(3)], axis=-1
        ).reshape(H * W, 3 * planes)
        acc += jnp.dot(patch.astype(jnp.bfloat16), w2_ref[ky],
                       preferred_element_type=jnp.float32)
    out2 = jnp.maximum(acc * bn2_ref[0:1, :] + bn2_ref[1:2, :], 0.0)

    # ---- stage 3: 1x1 conv + folded-BN + residual add + ReLU ----
    y3 = jnp.dot(out2.astype(jnp.bfloat16), w3_ref[...],
                 preferred_element_type=jnp.float32)
    y3 = y3 * bn3_ref[0:1, :] + bn3_ref[1:2, :] + x
    o_ref[...] = jnp.maximum(y3, 0.0).reshape(1, H, W, cout).astype(o_ref.dtype)


# ---------------------------------------------------------------------------
# Wrapper
# ---------------------------------------------------------------------------
def _fold_bn(p):
    """Fold conv bias + inference BatchNorm into y*scale + shift."""
    scale = p["gamma"] / jnp.sqrt(p["var"] + EPS)
    shift = p["beta"] + (p["b"] - p["mean"]) * scale
    return jnp.stack([scale, shift]).astype(jnp.float32)     # (2, C)


@jax.jit
def bottleneck_forward(x, params):
    """x: (N, H, W, inplanes) f32 -> (N, H, W, planes * expansion) f32."""
    N, H, W, cin = x.shape
    planes = params["conv1"]["w"].shape[1]
    cout = params["conv3"]["w"].shape[1]
    assert cout == cin, "Identity downsample requires inplanes == planes*expansion"

    w1 = params["conv1"]["w"].astype(jnp.bfloat16)                         # (Cin, P)
    w2 = params["conv2"]["w"].reshape(3, 3 * planes, planes).astype(jnp.bfloat16)
    w3 = params["conv3"]["w"].astype(jnp.bfloat16)                         # (P, Cout)
    bn1 = _fold_bn(params["conv1"])
    bn2 = _fold_bn(params["conv2"])
    bn3 = _fold_bn(params["conv3"])

    kernel = functools.partial(_bottleneck_kernel, H=H, W=W)
    out = pl.pallas_call(
        kernel,
        out_shape=jax.ShapeDtypeStruct((N, H, W, cout), x.dtype),
        grid=(N,),
        in_specs=[
            pl.BlockSpec((1, H, W, cin), lambda n: (n, 0, 0, 0)),
            pl.BlockSpec((cin, planes), lambda n: (0, 0)),
            pl.BlockSpec((3, 3 * planes, planes), lambda n: (0, 0, 0)),
            pl.BlockSpec((planes, cout), lambda n: (0, 0)),
            pl.BlockSpec((2, planes), lambda n: (0, 0)),
            pl.BlockSpec((2, planes), lambda n: (0, 0)),
            pl.BlockSpec((2, cout), lambda n: (0, 0)),
        ],
        out_specs=pl.BlockSpec((1, H, W, cout), lambda n: (n, 0, 0, 0)),
        scratch_shapes=[pltpu.VMEM((H + 2, W + 2, planes), jnp.float32)],
        compiler_params=pltpu.CompilerParams(
            dimension_semantics=("parallel",)),
    )(x, w1, w2, w3, bn1, bn2, bn3)
    # TODO(synk): for very large H*W*C on v7x (64 MiB VMEM / 2 TCs), tile the grid
    # over (N, row-bands) with a 1-row halo instead of one full image per step.
    return out


# ---------------------------------------------------------------------------
# Pure-JAX reference (exact f32 module math, for correctness checking)
# ---------------------------------------------------------------------------
def _bn_ref(y, p):
    return (y - p["mean"]) / jnp.sqrt(p["var"] + EPS) * p["gamma"] + p["beta"]


def bottleneck_ref(x, params):
    p = params["conv1"]
    out = jnp.einsum("nhwc,cd->nhwd", x, p["w"]) + p["b"]
    out = jax.nn.relu(_bn_ref(out, p))
    p = params["conv2"]
    out = lax.conv_general_dilated(
        out, p["w"], window_strides=(1, 1), padding="SAME",
        dimension_numbers=("NHWC", "HWIO", "NHWC")) + p["b"]
    out = jax.nn.relu(_bn_ref(out, p))
    p = params["conv3"]
    out = jnp.einsum("nhwc,cd->nhwd", out, p["w"]) + p["b"]
    out = _bn_ref(out, p)
    return jax.nn.relu(out + x)


# ---------------------------------------------------------------------------
# Deterministic parameter construction
# ---------------------------------------------------------------------------
def make_params(key, inplanes, planes, expansion=4):
    def conv_bn(key, cin, cout, kshape):
        ks = jax.random.split(key, 6)
        return {
            "w": 0.1 * jax.random.normal(ks[0], kshape, jnp.float32),
            "b": 0.1 * jax.random.normal(ks[1], (cout,), jnp.float32),
            "gamma": 1.0 + 0.1 * jax.random.normal(ks[2], (cout,), jnp.float32),
            "beta": 0.1 * jax.random.normal(ks[3], (cout,), jnp.float32),
            "mean": 0.1 * jax.random.normal(ks[4], (cout,), jnp.float32),
            "var": 1.0 + 0.1 * jax.random.uniform(ks[5], (cout,), jnp.float32),
        }

    k1, k2, k3 = jax.random.split(key, 3)
    return {
        "conv1": conv_bn(k1, inplanes, planes, (inplanes, planes)),
        "conv2": conv_bn(k2, planes, planes, (3, 3, planes, planes)),
        "conv3": conv_bn(k3, planes, planes * expansion,
                         (planes, planes * expansion)),
    }


if __name__ == "__main__":
    key = jax.random.PRNGKey(0)
    kx, kp = jax.random.split(key)

    N, H, W = 2, 8, 8
    planes, expansion = 8, 4
    inplanes = planes * expansion  # Identity downsample => residual shapes match

    x = jax.random.normal(kx, (N, H, W, inplanes), jnp.float32)
    params = make_params(kp, inplanes, planes, expansion)

    out = jax.block_until_ready(bottleneck_forward(x, params))
    ref = bottleneck_ref(x, params)

    assert out.shape == (N, H, W, planes * expansion)
    # Tolerance loosened vs. the f32 reference because matmul operands run in bf16.
    assert jnp.allclose(out, ref, atol=5e-2, rtol=5e-2), "mismatch vs reference"

    # TODO(synk): MinkowskiDropPath (drop_path>0) and non-Identity downsample are
    # not exercised here (module defaults make them Identity).
    print("KERNEL_OK")
</pallas_src>

<mosaic_0001>
module attributes {stable_mosaic.version = 11 : i64} {
  func.func @_bottleneck_kernel(%arg0: i32, %arg1: memref<1x8x8x32xf32, #tpu.memory_space<vmem>>, %arg2: memref<32x8xbf16, #tpu.memory_space<vmem>>, %arg3: memref<3x24x8xbf16, #tpu.memory_space<vmem>>, %arg4: memref<8x32xbf16, #tpu.memory_space<vmem>>, %arg5: memref<2x8xf32, #tpu.memory_space<vmem>>, %arg6: memref<2x8xf32, #tpu.memory_space<vmem>>, %arg7: memref<2x32xf32, #tpu.memory_space<vmem>>, %arg8: memref<1x8x8x32xf32, #tpu.memory_space<vmem>>, %arg9: memref<10x10x8xf32, #tpu.memory_space<vmem>>) attributes {dimension_semantics = [#tpu.dimension_semantics<parallel>], iteration_bounds = array<i64: 2>, scalar_prefetch = 0 : i64, scratch_operands = 1 : i64, tpu.core_type = #tpu.core_type<tc>, window_params = [{transform_indices = @transform_0, window_bounds = array<i64: 1, 8, 8, 32>}, {pipeline_mode = #tpu.pipeline_mode<synchronous>, transform_indices = @transform_1, window_bounds = array<i64: 32, 8>}, {pipeline_mode = #tpu.pipeline_mode<synchronous>, transform_indices = @transform_2, window_bounds = array<i64: 3, 24, 8>}, {pipeline_mode = #tpu.pipeline_mode<synchronous>, transform_indices = @transform_3, window_bounds = array<i64: 8, 32>}, {pipeline_mode = #tpu.pipeline_mode<synchronous>, transform_indices = @transform_4, window_bounds = array<i64: 2, 8>}, {pipeline_mode = #tpu.pipeline_mode<synchronous>, transform_indices = @transform_5, window_bounds = array<i64: 2, 8>}, {pipeline_mode = #tpu.pipeline_mode<synchronous>, transform_indices = @transform_6, window_bounds = array<i64: 2, 32>}, {transform_indices = @transform_7, window_bounds = array<i64: 1, 8, 8, 32>}]} {
    %c0 = arith.constant 0 : index
    %c0_0 = arith.constant 0 : index
    %c0_1 = arith.constant 0 : index
    %c0_2 = arith.constant 0 : index
    %0 = vector.load %arg1[%c0, %c0_0, %c0_1, %c0_2] : memref<1x8x8x32xf32, #tpu.memory_space<vmem>>, vector<1x8x8x32xf32>
    %1 = vector.shape_cast %0 : vector<1x8x8x32xf32> to vector<64x32xf32>
    %2 = arith.truncf %1 : vector<64x32xf32> to vector<64x32xbf16>
    %c0_3 = arith.constant 0 : index
    %c0_4 = arith.constant 0 : index
    %3 = vector.load %arg2[%c0_3, %c0_4] : memref<32x8xbf16, #tpu.memory_space<vmem>>, vector<32x8xbf16>
    %cst = arith.constant dense<0.000000e+00> : vector<64x8xf32>
    %4 = tpu.matmul %2, %3, %cst {dimension_numbers = #tpu.dot_dimension_numbers<[1], [0], [0], [1], [0, 0, 1, 1], [], []>} : vector<64x32xbf16>, vector<32x8xbf16>, vector<64x8xf32> -> vector<64x8xf32>
    %c0_5 = arith.constant 0 : index
    %c0_6 = arith.constant 0 : index
    %5 = vector.load %arg5[%c0_5, %c0_6] : memref<2x8xf32, #tpu.memory_space<vmem>>, vector<1x8xf32>
    %6 = vector.broadcast %5 : vector<1x8xf32> to vector<64x8xf32>
    %7 = arith.mulf %4, %6 : vector<64x8xf32>
    %c1 = arith.constant 1 : index
    %c0_7 = arith.constant 0 : index
    %8 = vector.load %arg5[%c1, %c0_7] : memref<2x8xf32, #tpu.memory_space<vmem>>, vector<1x8xf32>
    %9 = vector.broadcast %8 : vector<1x8xf32> to vector<64x8xf32>
    %10 = arith.addf %7, %9 : vector<64x8xf32>
    %cst_8 = arith.constant 0.000000e+00 : f32
    %11 = vector.broadcast %cst_8 : f32 to vector<64x8xf32>
    %12 = arith.maximumf %10, %11 : vector<64x8xf32>
    %cst_9 = arith.constant 0.000000e+00 : f32
    %13 = vector.broadcast %cst_9 : f32 to vector<10x10x8xf32>
    %c0_10 = arith.constant 0 : index
    %c0_11 = arith.constant 0 : index
    %c0_12 = arith.constant 0 : index
    %14 = vector.load %arg9[%c0_10, %c0_11, %c0_12] : memref<10x10x8xf32, #tpu.memory_space<vmem>>, vector<10x10x8xf32>
    tpu.vector_store %arg9[%c0_10, %c0_11, %c0_12], %13 {strides = array<i32>} : memref<10x10x8xf32, #tpu.memory_space<vmem>>, vector<10x10x8xf32>,
    %15 = vector.shape_cast %12 : vector<64x8xf32> to vector<8x8x8xf32>
    %c1_13 = arith.constant 1 : index
    %c1_14 = arith.constant 1 : index
    %c0_15 = arith.constant 0 : index
    %16 = vector.load %arg9[%c1_13, %c1_14, %c0_15] : memref<10x10x8xf32, #tpu.memory_space<vmem>>, vector<8x8x8xf32>
    tpu.vector_store %arg9[%c1_13, %c1_14, %c0_15], %15 {strides = array<i32>} : memref<10x10x8xf32, #tpu.memory_space<vmem>>, vector<8x8x8xf32>,
    %c0_16 = arith.constant 0 : index
    %c0_17 = arith.constant 0 : index
    %c0_18 = arith.constant 0 : index
    %17 = vector.load %arg9[%c0_16, %c0_17, %c0_18] : memref<10x10x8xf32, #tpu.memory_space<vmem>>, vector<10x10x8xf32>
    %cst_19 = arith.constant 0.000000e+00 : f32
    %18 = vector.broadcast %cst_19 : f32 to vector<64x8xf32>
    %19 = vector.extract_strided_slice %17 {offsets = [0, 0, 0], sizes = [8, 8, 8], strides = [1, 1, 1]} : vector<10x10x8xf32> to vector<8x8x8xf32>
    %20 = vector.extract_strided_slice %17 {offsets = [0, 1, 0], sizes = [8, 8, 8], strides = [1, 1, 1]} : vector<10x10x8xf32> to vector<8x8x8xf32>
    %21 = vector.extract_strided_slice %17 {offsets = [0, 2, 0], sizes = [8, 8, 8], strides = [1, 1, 1]} : vector<10x10x8xf32> to vector<8x8x8xf32>
    %22 = tpu.concatenate %19, %20, %21 in 2 : vector<8x8x8xf32>, vector<8x8x8xf32>, vector<8x8x8xf32> -> vector<8x8x24xf32>
    %23 = vector.shape_cast %22 : vector<8x8x24xf32> to vector<64x24xf32>
    %24 = arith.truncf %23 : vector<64x24xf32> to vector<64x24xbf16>
    %c0_20 = arith.constant 0 : index
    %c0_21 = arith.constant 0 : index
    %c0_22 = arith.constant 0 : index
    %25 = vector.load %arg3[%c0_20, %c0_21, %c0_22] : memref<3x24x8xbf16, #tpu.memory_space<vmem>>, vector<1x24x8xbf16>
    %26 = vector.shape_cast %25 : vector<1x24x8xbf16> to vector<24x8xbf16>
    %cst_23 = arith.constant dense<0.000000e+00> : vector<64x8xf32>
    %27 = tpu.matmul %24, %26, %cst_23 {dimension_numbers = #tpu.dot_dimension_numbers<[1], [0], [0], [1], [0, 0, 1, 1], [], []>} : vector<64x24xbf16>, vector<24x8xbf16>, vector<64x8xf32> -> vector<64x8xf32>
    %28 = arith.addf %18, %27 : vector<64x8xf32>
    %29 = vector.extract_strided_slice %17 {offsets = [1, 0, 0], sizes = [8, 8, 8], strides = [1, 1, 1]} : vector<10x10x8xf32> to vector<8x8x8xf32>
    %30 = vector.extract_strided_slice %17 {offsets = [1, 1, 0], sizes = [8, 8, 8], strides = [1, 1, 1]} : vector<10x10x8xf32> to vector<8x8x8xf32>
    %31 = vector.extract_strided_slice %17 {offsets = [1, 2, 0], sizes = [8, 8, 8], strides = [1, 1, 1]} : vector<10x10x8xf32> to vector<8x8x8xf32>
    %32 = tpu.concatenate %29, %30, %31 in 2 : vector<8x8x8xf32>, vector<8x8x8xf32>, vector<8x8x8xf32> -> vector<8x8x24xf32>
    %33 = vector.shape_cast %32 : vector<8x8x24xf32> to vector<64x24xf32>
    %34 = arith.truncf %33 : vector<64x24xf32> to vector<64x24xbf16>
    %c1_24 = arith.constant 1 : index
    %c0_25 = arith.constant 0 : index
    %c0_26 = arith.constant 0 : index
    %35 = vector.load %arg3[%c1_24, %c0_25, %c0_26] : memref<3x24x8xbf16, #tpu.memory_space<vmem>>, vector<1x24x8xbf16>
    %36 = vector.shape_cast %35 : vector<1x24x8xbf16> to vector<24x8xbf16>
    %cst_27 = arith.constant dense<0.000000e+00> : vector<64x8xf32>
    %37 = tpu.matmul %34, %36, %cst_27 {dimension_numbers = #tpu.dot_dimension_numbers<[1], [0], [0], [1], [0, 0, 1, 1], [], []>} : vector<64x24xbf16>, vector<24x8xbf16>, vector<64x8xf32> -> vector<64x8xf32>
    %38 = arith.addf %28, %37 : vector<64x8xf32>
    %39 = vector.extract_strided_slice %17 {offsets = [2, 0, 0], sizes = [8, 8, 8], strides = [1, 1, 1]} : vector<10x10x8xf32> to vector<8x8x8xf32>
    %40 = vector.extract_strided_slice %17 {offsets = [2, 1, 0], sizes = [8, 8, 8], strides = [1, 1, 1]} : vector<10x10x8xf32> to vector<8x8x8xf32>
    %41 = vector.extract_strided_slice %17 {offsets = [2, 2, 0], sizes = [8, 8, 8], strides = [1, 1, 1]} : vector<10x10x8xf32> to vector<8x8x8xf32>
    %42 = tpu.concatenate %39, %40, %41 in 2 : vector<8x8x8xf32>, vector<8x8x8xf32>, vector<8x8x8xf32> -> vector<8x8x24xf32>
    %43 = vector.shape_cast %42 : vector<8x8x24xf32> to vector<64x24xf32>
    %44 = arith.truncf %43 : vector<64x24xf32> to vector<64x24xbf16>
    %c2 = arith.constant 2 : index
    %c0_28 = arith.constant 0 : index
    %c0_29 = arith.constant 0 : index
    %45 = vector.load %arg3[%c2, %c0_28, %c0_29] : memref<3x24x8xbf16, #tpu.memory_space<vmem>>, vector<1x24x8xbf16>
    %46 = vector.shape_cast %45 : vector<1x24x8xbf16> to vector<24x8xbf16>
    %cst_30 = arith.constant dense<0.000000e+00> : vector<64x8xf32>
    %47 = tpu.matmul %44, %46, %cst_30 {dimension_numbers = #tpu.dot_dimension_numbers<[1], [0], [0], [1], [0, 0, 1, 1], [], []>} : vector<64x24xbf16>, vector<24x8xbf16>, vector<64x8xf32> -> vector<64x8xf32>
    %48 = arith.addf %38, %47 : vector<64x8xf32>
    %c0_31 = arith.constant 0 : index
    %c0_32 = arith.constant 0 : index
    %49 = vector.load %arg6[%c0_31, %c0_32] : memref<2x8xf32, #tpu.memory_space<vmem>>, vector<1x8xf32>
    %50 = vector.broadcast %49 : vector<1x8xf32> to vector<64x8xf32>
    %51 = arith.mulf %48, %50 : vector<64x8xf32>
    %c1_33 = arith.constant 1 : index
    %c0_34 = arith.constant 0 : index
    %52 = vector.load %arg6[%c1_33, %c0_34] : memref<2x8xf32, #tpu.memory_space<vmem>>, vector<1x8xf32>
    %53 = vector.broadcast %52 : vector<1x8xf32> to vector<64x8xf32>
    %54 = arith.addf %51, %53 : vector<64x8xf32>
    %cst_35 = arith.constant 0.000000e+00 : f32
    %55 = vector.broadcast %cst_35 : f32 to vector<64x8xf32>
    %56 = arith.maximumf %54, %55 : vector<64x8xf32>
    %57 = arith.truncf %56 : vector<64x8xf32> to vector<64x8xbf16>
    %c0_36 = arith.constant 0 : index
    %c0_37 = arith.constant 0 : index
    %58 = vector.load %arg4[%c0_36, %c0_37] : memref<8x32xbf16, #tpu.memory_space<vmem>>, vector<8x32xbf16>
    %cst_38 = arith.constant dense<0.000000e+00> : vector<64x32xf32>
    %59 = tpu.matmul %57, %58, %cst_38 {dimension_numbers = #tpu.dot_dimension_numbers<[1], [0], [0], [1], [0, 0, 1, 1], [], []>} : vector<64x8xbf16>, vector<8x32xbf16>, vector<64x32xf32> -> vector<64x32xf32>
    %c0_39 = arith.constant 0 : index
    %c0_40 = arith.constant 0 : index
    %60 = vector.load %arg7[%c0_39, %c0_40] : memref<2x32xf32, #tpu.memory_space<vmem>>, vector<1x32xf32>
    %61 = vector.broadcast %60 : vector<1x32xf32> to vector<64x32xf32>
    %62 = arith.mulf %59, %61 : vector<64x32xf32>
    %c1_41 = arith.constant 1 : index
    %c0_42 = arith.constant 0 : index
    %63 = vector.load %arg7[%c1_41, %c0_42] : memref<2x32xf32, #tpu.memory_space<vmem>>, vector<1x32xf32>
    %64 = vector.broadcast %63 : vector<1x32xf32> to vector<64x32xf32>
    %65 = arith.addf %62, %64 : vector<64x32xf32>
    %66 = arith.addf %65, %1 : vector<64x32xf32>
    %cst_43 = arith.constant 0.000000e+00 : f32
    %67 = vector.broadcast %cst_43 : f32 to vector<64x32xf32>
    %68 = arith.maximumf %66, %67 : vector<64x32xf32>
    %69 = vector.shape_cast %68 : vector<64x32xf32> to vector<1x8x8x32xf32>
    %c0_44 = arith.constant 0 : index
    %c0_45 = arith.constant 0 : index
    %c0_46 = arith.constant 0 : index
    %c0_47 = arith.constant 0 : index
    %70 = vector.load %arg8[%c0_44, %c0_45, %c0_46, %c0_47] : memref<1x8x8x32xf32, #tpu.memory_space<vmem>>, vector<1x8x8x32xf32>
    tpu.vector_store %arg8[%c0_44, %c0_45, %c0_46, %c0_47], %69 {strides = array<i32>} : memref<1x8x8x32xf32, #tpu.memory_space<vmem>>, vector<1x8x8x32xf32>,
    return
  }
  func.func @transform_0(%arg0: i32) -> (i32, i32, i32, i32) {
    %c0_i32 = arith.constant 0 : i32
    %c0_i32_0 = arith.constant 0 : i32
    %c0_i32_1 = arith.constant 0 : i32
    %c0_i32_2 = arith.constant 0 : i32
    return %arg0, %c0_i32, %c0_i32_0, %c0_i32_1 : i32, i32, i32, i32
  }
  func.func @transform_1(%arg0: i32) -> (i32, i32) {
    %c0_i32 = arith.constant 0 : i32
    %c0_i32_0 = arith.constant 0 : i32
    %c0_i32_1 = arith.constant 0 : i32
    return %c0_i32, %c0_i32_0 : i32, i32
  }
  func.func @transform_2(%arg0: i32) -> (i32, i32, i32) {
    %c0_i32 = arith.constant 0 : i32
    %c0_i32_0 = arith.constant 0 : i32
    %c0_i32_1 = arith.constant 0 : i32
    %c0_i32_2 = arith.constant 0 : i32
    return %c0_i32, %c0_i32_0, %c0_i32_1 : i32, i32, i32
  }
  func.func @transform_3(%arg0: i32) -> (i32, i32) {
    %c0_i32 = arith.constant 0 : i32
    %c0_i32_0 = arith.constant 0 : i32
    %c0_i32_1 = arith.constant 0 : i32
    return %c0_i32, %c0_i32_0 : i32, i32
  }
  func.func @transform_4(%arg0: i32) -> (i32, i32) {
    %c0_i32 = arith.constant 0 : i32
    %c0_i32_0 = arith.constant 0 : i32
    %c0_i32_1 = arith.constant 0 : i32
    return %c0_i32, %c0_i32_0 : i32, i32
  }
  func.func @transform_5(%arg0: i32) -> (i32, i32) {
    %c0_i32 = arith.constant 0 : i32
    %c0_i32_0 = arith.constant 0 : i32
    %c0_i32_1 = arith.constant 0 : i32
    return %c0_i32, %c0_i32_0 : i32, i32
  }
  func.func @transform_6(%arg0: i32) -> (i32, i32) {
    %c0_i32 = arith.constant 0 : i32
    %c0_i32_0 = arith.constant 0 : i32
    %c0_i32_1 = arith.constant 0 : i32
    return %c0_i32, %c0_i32_0 : i32, i32
  }
  func.func @transform_7(%arg0: i32) -> (i32, i32, i32, i32) {
    %c0_i32 = arith.constant 0 : i32
    %c0_i32_0 = arith.constant 0 : i32
    %c0_i32_1 = arith.constant 0 : i32
    %c0_i32_2 = arith.constant 0 : i32
    return %arg0, %c0_i32, %c0_i32_0, %c0_i32_1 : i32, i32, i32, i32
  }
}

</mosaic_0001>

<llo_original>
// kernel: bottleneck_forward.1
$region0: #{bottleneck_forward.1}
  #allocation0 [shape = 'u32[]', space=smem, size = 0x4, offset = 0x4, fixed_abs, tag = 'smem constant byte address 0x4 - core index']
  #allocation1 [shape = 'u32[144,128]{1,0:T(1,128)}', space=vmem, size = 0x12000, scoped, tag = 'internal scratch']
  #allocation2 [shape = 'f32[10,10,8]{2,1,0:T(8,128)}', space=vmem, size = 0x14000, scoped, tag = 'scratch operand']
  %s0 = inlined_call_operand.vmem [shape: f32[2,8,8,32], index: 0, kind: input, shape index: {}]
  %s1 = inlined_call_operand.vmem [shape: bf16[32,8], index: 1, kind: input, shape index: {}]
  %s2 = inlined_call_operand.vmem [shape: bf16[3,24,8], index: 2, kind: input, shape index: {}]
  %s3 = inlined_call_operand.vmem [shape: bf16[8,32], index: 3, kind: input, shape index: {}]
  %s4 = inlined_call_operand.vmem [shape: f32[2,8], index: 4, kind: input, shape index: {}]
  %s5 = inlined_call_operand.vmem [shape: f32[2,8], index: 5, kind: input, shape index: {}]
  %s6 = inlined_call_operand.vmem [shape: f32[2,32], index: 6, kind: input, shape index: {}]
  %s7 = inlined_call_operand.hbm [shape: f32[2,8,8,32], index: 7, kind: output, shape index: {}]
  %s8 = sld [smem:[#allocation0]]
  $region61: #{bottleneck_forward.1} parent=0
    _
  %s10 = ssub.s32 1, %s8
  %s11 = scalar_select 0, %s10, %s8
  $region1: #{bottleneck_forward.1} parent=0
    #allocation3 [shape = 'u8[65536]{0}', space=vmem, size = 0x10000, scoped, tag = 'output window, operand 0']
    #allocation4 [shape = 's32[2]{0}', space=sflag, size = 0x8, scoped, tag = 'scoped memory for bottleneck_forward.1']
    %12 = vsyncpa [#allocation4], 0
    %s13 = scalar_lea.sflag [#allocation4], 1
    %14 = vsyncpa %s13, 0
    loop: start=0, step=1, limit=4
    $region2: #{bottleneck_forward.1} parent=1 // loop_pre_header
      _
    $region3: #{bottleneck_forward.1} parent=1 // loop_header
      %s16 = sphi 0, %s20
      %p17 = scmp.ge.s32.totalorder %s16, 4
      %s26 = sphi 0, %s28
      %s29 = sphi 0, %s26
      %s30 = sphi 0, %s29
      %s46 = sphi 0, %s30
      %s50 = sphi 0, %s50
      %s52 = sphi 0, %s50
      %s53 = sphi 0, %s52
      %s67 = sphi 0, %s53
      %s71 = sphi 0, %s71
      %s73 = sphi 0, %s71
      %s74 = sphi 0, %s73
      %s88 = sphi 0, %s74
      %s92 = sphi 0, %s92
      %s94 = sphi 0, %s92
      %s95 = sphi 0, %s94
      %s109 = sphi 0, %s95
      %s113 = sphi 0, %s113
      %s115 = sphi 0, %s113
      %s116 = sphi 0, %s115
      %s130 = sphi 0, %s116
      %s134 = sphi 0, %s134
      %s136 = sphi 0, %s134
      %s137 = sphi 0, %s136
      %s151 = sphi 0, %s137
      %s155 = sphi 0, %s155
      %s157 = sphi 0, %s155
      %s158 = sphi 0, %s157
      %s172 = sphi 0, %s158
      %s178 = sphi 0, %s180
      %s181 = sphi 0, %s178
      %s182 = sphi 0, %s181
      %s198 = sphi 0, %s182
    $region4: #{bottleneck_forward.1} parent=1 // loop_header_branch
      %19 = sbr.rel (%p17) target = $region8
    $region5: #{bottleneck_forward.1} parent=1 // loop_body
      %s21 = ssub.s32 %s16, 1
      %s22 = ssub.s32 %s16, 2
      %s23 = sadd.s32 %s16, 1
      %s24 = ssub.s32 %s16, %s23
      %p25 = scmp.eq.s32.totalorder %s24, 0
      %s27 = sadd.s32 %s26, 1
      %s28 = scalar_select %p25, %s26, %s27
      %p31 = pneg %p25
      %p32 = scmp.eq.s32.totalorder %s16, 1
      %p33 = por %p31, %p32
      %p34 = scmp.ne.s32.totalorder %s26, %s29
      %p35 = scmp.eq.s32.totalorder %s16, 0
      %p36 = por %p34, %p35
      %p37 = scmp.ne.s32.totalorder %s26, %s29
      %p38 = scmp.eq.s32.totalorder %s21, 1
      %p39 = por %p37, %p38
      %p40 = scmp.ne.s32.totalorder %s29, %s30
      %p41 = scmp.eq.s32.totalorder %s21, 0
      %p42 = por %p40, %p41
      %p43 = scmp.ne.s32.totalorder %s29, %s30
      %p44 = scmp.eq.s32.totalorder %s22, 1
      %p45 = por %p43, %p44
      %p47 = scmp.ne.s32.totalorder %s30, %s46
      %p48 = scmp.eq.s32.totalorder %s22, 0
      %p49 = por %p47, %p48
      %s51 = sadd.s32 %s50, 1
      %p54 = scmp.eq.s32.totalorder %s16, 1
      %p55 = scmp.ne.s32.totalorder %s50, %s52
      %p56 = scmp.eq.s32.totalorder %s16, 0
      %p57 = por %p55, %p56
      %p58 = scmp.ne.s32.totalorder %s50, %s52
      %p59 = scmp.eq.s32.totalorder %s21, 1
      %p60 = por %p58, %p59
      %p61 = scmp.ne.s32.totalorder %s52, %s53
      %p62 = scmp.eq.s32.totalorder %s21, 0
      %p63 = por %p61, %p62
      %p64 = scmp.ne.s32.totalorder %s52, %s53
      %p65 = scmp.eq.s32.totalorder %s22, 1
      %p66 = por %p64, %p65
      %p68 = scmp.ne.s32.totalorder %s53, %s67
      %p69 = scmp.eq.s32.totalorder %s22, 0
      %p70 = por %p68, %p69
      %s72 = sadd.s32 %s71, 1
      %p75 = scmp.eq.s32.totalorder %s16, 1
      %p76 = scmp.ne.s32.totalorder %s71, %s73
      %p77 = scmp.eq.s32.totalorder %s16, 0
      %p78 = por %p76, %p77
      %p79 = scmp.ne.s32.totalorder %s71, %s73
      %p80 = scmp.eq.s32.totalorder %s21, 1
      %p81 = por %p79, %p80
      %p82 = scmp.ne.s32.totalorder %s73, %s74
      %p83 = scmp.eq.s32.totalorder %s21, 0
      %p84 = por %p82, %p83
      %p85 = scmp.ne.s32.totalorder %s73, %s74
      %p86 = scmp.eq.s32.totalorder %s22, 1
      %p87 = por %p85, %p86
      %p89 = scmp.ne.s32.totalorder %s74, %s88
      %p90 = scmp.eq.s32.totalorder %s22, 0
      %p91 = por %p89, %p90
      %s93 = sadd.s32 %s92, 1
      %p96 = scmp.eq.s32.totalorder %s16, 1
      %p97 = scmp.ne.s32.totalorder %s92, %s94
      %p98 = scmp.eq.s32.totalorder %s16, 0
      %p99 = por %p97, %p98
      %p100 = scmp.ne.s32.totalorder %s92, %s94
      %p101 = scmp.eq.s32.totalorder %s21, 1
      %p102 = por %p100, %p101
      %p103 = scmp.ne.s32.totalorder %s94, %s95
      %p104 = scmp.eq.s32.totalorder %s21, 0
      %p105 = por %p103, %p104
      %p106 = scmp.ne.s32.totalorder %s94, %s95
      %p107 = scmp.eq.s32.totalorder %s22, 1
      %p108 = por %p106, %p107
      %p110 = scmp.ne.s32.totalorder %s95, %s109
      %p111 = scmp.eq.s32.totalorder %s22, 0
      %p112 = por %p110, %p111
      %s114 = sadd.s32 %s113, 1
      %p117 = scmp.eq.s32.totalorder %s16, 1
      %p118 = scmp.ne.s32.totalorder %s113, %s115
      %p119 = scmp.eq.s32.totalorder %s16, 0
      %p120 = por %p118, %p119
      %p121 = scmp.ne.s32.totalorder %s113, %s115
      %p122 = scmp.eq.s32.totalorder %s21, 1
      %p123 = por %p121, %p122
      %p124 = scmp.ne.s32.totalorder %s115, %s116
      %p125 = scmp.eq.s32.totalorder %s21, 0
      %p126 = por %p124, %p125
      %p127 = scmp.ne.s32.totalorder %s115, %s116
      %p128 = scmp.eq.s32.totalorder %s22, 1
      %p129 = por %p127, %p128
      %p131 = scmp.ne.s32.totalorder %s116, %s130
      %p132 = scmp.eq.s32.totalorder %s22, 0
      %p133 = por %p131, %p132
      %s135 = sadd.s32 %s134, 1
      %p138 = scmp.eq.s32.totalorder %s16, 1
      %p139 = scmp.ne.s32.totalorder %s134, %s136
      %p140 = scmp.eq.s32.totalorder %s16, 0
      %p141 = por %p139, %p140
      %p142 = scmp.ne.s32.totalorder %s134, %s136
      %p143 = scmp.eq.s32.totalorder %s21, 1
      %p144 = por %p142, %p143
      %p145 = scmp.ne.s32.totalorder %s136, %s137
      %p146 = scmp.eq.s32.totalorder %s21, 0
      %p147 = por %p145, %p146
      %p148 = scmp.ne.s32.totalorder %s136, %s137
      %p149 = scmp.eq.s32.totalorder %s22, 1
      %p150 = por %p148, %p149
      %p152 = scmp.ne.s32.totalorder %s137, %s151
      %p153 = scmp.eq.s32.totalorder %s22, 0
      %p154 = por %p152, %p153
      %s156 = sadd.s32 %s155, 1
      %p159 = scmp.eq.s32.totalorder %s16, 1
      %p160 = scmp.ne.s32.totalorder %s155, %s157
      %p161 = scmp.eq.s32.totalorder %s16, 0
      %p162 = por %p160, %p161
      %p163 = scmp.ne.s32.totalorder %s155, %s157
      %p164 = scmp.eq.s32.totalorder %s21, 1
      %p165 = por %p163, %p164
      %p166 = scmp.ne.s32.totalorder %s157, %s158
      %p167 = scmp.eq.s32.totalorder %s21, 0
      %p168 = por %p166, %p167
      %p169 = scmp.ne.s32.totalorder %s157, %s158
      %p170 = scmp.eq.s32.totalorder %s22, 1
      %p171 = por %p169, %p170
      %p173 = scmp.ne.s32.totalorder %s158, %s172
      %p174 = scmp.eq.s32.totalorder %s22, 0
      %p175 = por %p173, %p174
      %s176 = ssub.s32 %s16, %s23
      %p177 = scmp.eq.s32.totalorder %s176, 0
      %s179 = sadd.s32 %s178, 1
      %s180 = scalar_select %p177, %s178, %s179
      %p183 = pneg %p177
      %p184 = scmp.eq.s32.totalorder %s16, 1
      %p185 = por %p183, %p184
      %p186 = scmp.ne.s32.totalorder %s178, %s181
      %p187 = scmp.eq.s32.totalorder %s16, 0
      %p188 = por %p186, %p187
      %p189 = scmp.ne.s32.totalorder %s178, %s181
      %p190 = scmp.eq.s32.totalorder %s21, 1
      %p191 = por %p189, %p190
      %p192 = scmp.ne.s32.totalorder %s181, %s182
      %p193 = scmp.eq.s32.totalorder %s21, 0
      %p194 = por %p192, %p193
      %p195 = scmp.ne.s32.totalorder %s181, %s182
      %p196 = scmp.eq.s32.totalorder %s22, 1
      %p197 = por %p195, %p196
      %p199 = scmp.ne.s32.totalorder %s182, %s198
      %p200 = scmp.eq.s32.totalorder %s22, 0
      %p201 = por %p199, %p200
      %p202 = scmp.le.s32.totalorder 1, %s16
      %p203 = scmp.lt.s32.totalorder %s16, 3
      %p204 = pnand %p202, %p203
      %p205 = pneg %p204
      // Predicated region
      $region9: #{bottleneck_forward.1} parent=5 // pred_check
        _
      $region10: #{bottleneck_forward.1} parent=5 // pred_check_branch
        %207 = sbr.rel (%p204) target = $region12
      $region11: #{bottleneck_forward.1} parent=5 // pred_region
        %s208 = ssub.s32 %s16, 1
        // Predicated region
        $region13: #{bottleneck_forward.1} parent=11 // pred_check
          %p209 = pneg %p63
        $region14: #{bottleneck_forward.1} parent=11 // pred_check_branch
          %211 = sbr.rel (%p209) target = $region16
        $region15: #{bottleneck_forward.1} parent=11 // pred_region
          _
        $region16: #{bottleneck_forward.1} parent=11 // pred_fallthru
          _
        // Predicated region
        $region17: #{bottleneck_forward.1} parent=11 // pred_check
          %p212 = pneg %p84
        $region18: #{bottleneck_forward.1} parent=11 // pred_check_branch
          %214 = sbr.rel (%p212) target = $region20
        $region19: #{bottleneck_forward.1} parent=11 // pred_region
          _
        $region20: #{bottleneck_forward.1} parent=11 // pred_fallthru
          _
        // Predicated region
        $region21: #{bottleneck_forward.1} parent=11 // pred_check
          %p215 = pneg %p105
        $region22: #{bottleneck_forward.1} parent=11 // pred_check_branch
          %217 = sbr.rel (%p215) target = $region24
        $region23: #{bottleneck_forward.1} parent=11 // pred_region
          _
        $region24: #{bottleneck_forward.1} parent=11 // pred_fallthru
          _
        // Predicated region
        $region25: #{bottleneck_forward.1} parent=11 // pred_check
          %p218 = pneg %p126
        $region26: #{bottleneck_forward.1} parent=11 // pred_check_branch
          %220 = sbr.rel (%p218) target = $region28
        $region27: #{bottleneck_forward.1} parent=11 // pred_region
          _
        $region28: #{bottleneck_forward.1} parent=11 // pred_fallthru
          _
        // Predicated region
        $region29: #{bottleneck_forward.1} parent=11 // pred_check
          %p221 = pneg %p147
        $region30: #{bottleneck_forward.1} parent=11 // pred_check_branch
          %223 = sbr.rel (%p221) target = $region32
        $region31: #{bottleneck_forward.1} parent=11 // pred_region
          _
        $region32: #{bottleneck_forward.1} parent=11 // pred_fallthru
          _
        // Predicated region
        $region33: #{bottleneck_forward.1} parent=11 // pred_check
          %p224 = pneg %p168
        $region34: #{bottleneck_forward.1} parent=11 // pred_check_branch
          %226 = sbr.rel (%p224) target = $region36
        $region35: #{bottleneck_forward.1} parent=11 // pred_region
          _
        $region36: #{bottleneck_forward.1} parent=11 // pred_fallthru
          _
      $region12: #{bottleneck_forward.1} parent=5 // pred_fallthru
        _
      %p227 = scmp.lt.s32.totalorder %s16, 2
      // Predicated region
      $region37: #{bottleneck_forward.1} parent=5 // pred_check
        %p228 = pneg %p227
      $region38: #{bottleneck_forward.1} parent=5 // pred_check_branch
        %230 = sbr.rel (%p228) target = $region40
      $region39: #{bottleneck_forward.1} parent=5 // pred_region
        // Predicated region
        $region41: #{bottleneck_forward.1} parent=39 // pred_check
          %p231 = pneg %p36
        $region42: #{bottleneck_forward.1} parent=39 // pred_check_branch
          %233 = sbr.rel (%p231) target = $region44
        $region43: #{bottleneck_forward.1} parent=39 // pred_region
          %p234 = scmp.lt.s32.totalorder %s16, 1
          %s235 = scalar_select %p234, %s16, 1
          %s236 = smul.addr %s235, 8
          %s237 = smul.addr %s236, 8
          %s238 = scalar_lea.vmem %s0, %s237
        $region44: #{bottleneck_forward.1} parent=39 // pred_fallthru
          _
      $region40: #{bottleneck_forward.1} parent=5 // pred_fallthru
        _
      %p239 = scmp.le.s32.totalorder 1, %s16
      %p240 = scmp.lt.s32.totalorder %s16, 3
      %p241 = pnand %p239, %p240
      %p242 = pneg %p241
      // Predicated region
      $region45: #{bottleneck_forward.1} parent=5 // pred_check
        _
      $region46: #{bottleneck_forward.1} parent=5 // pred_check_branch
        %244 = sbr.rel (%p241) target = $region48
      $region47: #{bottleneck_forward.1} parent=5 // pred_region
        %s245 = ssub.s32 %s16, 1
        %p246 = scmp.lt.s32.totalorder %s21, 1
        %s247 = scalar_select %p246, %s21, 1
        %s248 = smul.addr %s247, 8
        %s249 = smul.addr %s248, 8
        %s250 = scalar_lea.vmem %s0, %s249
        %p251 = pneg %p42
        %p252 = pneg %p39
        %p253 = pneg %p63
        %p254 = pneg %p60
        %p255 = pneg %p84
        %p256 = pneg %p81
        %p257 = pneg %p105
        %p258 = pneg %p102
        %p259 = pneg %p126
        %p260 = pneg %p123
        %p261 = pneg %p147
        %p262 = pneg %p144
        %p263 = pneg %p168
        %p264 = pneg %p165
        %p265 = pneg %p194
        %p266 = pneg %p191
        %s267 = sand.u32 %s181, 1
        %s268 = scalar_lea.sflag [#allocation4], %s267
        %s269 = sand.u32 %s181, 1
        %s270 = smul.addr %s269, 64
        %s271 = scalar_lea.vmem [#allocation3], %s270
        %p272 = scmp.lt.s32.totalorder %s21, 1
        %s273 = scalar_select %p272, %s21, 1
        %s274 = smul.addr %s273, 8
        %s275 = smul.addr %s274, 8
        %s276 = scalar_lea.vmem %s0, %s275
        %v278 = vld [vmem:[%s276] sm:$0xff]
        %v279 = vld [vmem:[%s276 + $0x8] sm:$0xff]
        %v280 = vld [vmem:[%s276 + $0x10] sm:$0xff]
        %v281 = vld [vmem:[%s276 + $0x18] sm:$0xff]
        %v282 = vld [vmem:[%s276 + $0x20] sm:$0xff]
        %v283 = vld [vmem:[%s276 + $0x28] sm:$0xff]
        %v284 = vld [vmem:[%s276 + $0x30] sm:$0xff]
        %v285 = vld [vmem:[%s276 + $0x38] sm:$0xff]
        %v286 = vpack.c.bf16 %v279, %v278
        %v287 = vpack.c.bf16 %v281, %v280
        %v288 = vpack.c.bf16 %v283, %v282
        %v289 = vpack.c.bf16 %v285, %v284
        %v290 = vld [vmem:[%s1] sm:$0xf]
        %v291 = vld [vmem:[%s1 + $0x4] sm:$0xf]
        %v292 = vld [vmem:[%s1 + $0x8] sm:$0xf]
        %v293 = vld [vmem:[%s1 + $0xc] sm:$0xf]
        %v298 = vunpack.c.l.b16 %v290
        %v299 = vunpack.c.l.b16 %v291
        %v300 = vunpack.c.l.b16 %v292
        %v301 = vunpack.c.l.b16 %v293
        %v302 = vpack.c.b16 %v299, %v298
        %v303 = vpack.c.b16 %v301, %v300
        %vm306 = vcmask 261120
        %v308 = vsel %vm306, %v286, 0
        %v311 = vsel %vm306, %v287, 0
        %v314 = vsel %vm306, %v288, 0
        %v317 = vsel %vm306, %v289, 0
        %319 = vmatprep.subr.bf16.mxu0 0
        %320 = vmatpush1.bf16.msra.mxu0 %v302
        %321 = vmatprep.subr.bf16.mxu0 0
        %322 = vmatpush1.bf16.msra.mxu0 %v303
        %323 = vmatprep.subr.bf16.mxu0 0
        %324 = vmatpush1.bf16.msra.mxu0 0
        %325 = vmatprep.subr.bf16.mxu0 0
        %326 = vmatpush1.bf16.msra.mxu0 0
        %327 = vmatprep.subr.bf16.mxu0 0
        %328 = vmatpush1.bf16.msra.mxu0 0
        %329 = vmatprep.subr.bf16.mxu0 0
        %330 = vmatpush1.bf16.msra.mxu0 0
        %331 = vmatprep.subr.bf16.mxu0 0
        %332 = vmatpush1.bf16.msra.mxu0 0
        %333 = vmatprep.subr.bf16.mxu0 0
        %334 = vmatpush1.bf16.msra.mxu0 0
        %335 = vmatprep.subr.bf16.mxu0 0
        %336 = vmatpush1.bf16.msra.mxu0 0
        %337 = vmatprep.subr.bf16.mxu0 0
        %338 = vmatpush1.bf16.msra.mxu0 0
        %339 = vmatprep.subr.bf16.mxu0 0
        %340 = vmatpush1.bf16.msra.mxu0 0
        %341 = vmatprep.subr.bf16.mxu0 0
        %342 = vmatpush1.bf16.msra.mxu0 0
        %343 = vmatprep.subr.bf16.mxu0 0
        %344 = vmatpush1.bf16.msra.mxu0 0
        %345 = vmatprep.subr.bf16.mxu0 0
        %346 = vmatpush1.bf16.msra.mxu0 0
        %347 = vmatprep.subr.bf16.mxu0 0
        %348 = vmatpush1.bf16.msra.mxu0 0
        %349 = vmatprep.subr.bf16.mxu0 0
        %350 = vmatpush1.bf16.msra.mxu0 0
        %351 = vmatprep.mubr.bf16.mxu0 0
        %352 = vmatmul.mubr.bf16.gmra.mrb[0].mxu0 %v308
        %v353 = vpop.f32.mrb[0].mxu0
        %v354 = vadd.f32 0.0, %v353
        %v355 = vpop.f32.mrb[0].mxu0
        %v356 = vpop.f32.mrb[0].mxu0
        %v357 = vadd.f32 0.0, %v356
        %v358 = vpop.f32.mrb[0].mxu0
        %359 = vmatprep.mubr.bf16.mxu0 0
        %360 = vmatmul.mubr.bf16.gmra.mrb[0].mxu0 %v311
        %v361 = vpop.f32.mrb[0].mxu0
        %v362 = vadd.f32 0.0, %v361
        %v363 = vpop.f32.mrb[0].mxu0
        %v364 = vpop.f32.mrb[0].mxu0
        %v365 = vadd.f32 0.0, %v364
        %v366 = vpop.f32.mrb[0].mxu0
        %367 = vmatprep.mubr.bf16.mxu0 0
        %368 = vmatmul.mubr.bf16.gmra.mrb[0].mxu0 %v314
        %v369 = vpop.f32.mrb[0].mxu0
        %v370 = vadd.f32 0.0, %v369
        %v371 = vpop.f32.mrb[0].mxu0
        %v372 = vpop.f32.mrb[0].mxu0
        %v373 = vadd.f32 0.0, %v372
        %v374 = vpop.f32.mrb[0].mxu0
        %375 = vmatprep.mubr.bf16.mxu0 0
        %376 = vmatmul.mubr.bf16.gmra.mrb[0].mxu0 %v317
        %v377 = vpop.f32.mrb[0].mxu0
        %v378 = vadd.f32 0.0, %v377
        %v379 = vpop.f32.mrb[0].mxu0
        %v380 = vpop.f32.mrb[0].mxu0
        %v381 = vadd.f32 0.0, %v380
        %v382 = vpop.f32.mrb[0].mxu0
        %383 = vdwg.mxu0
        %v384 = vld [vmem:[%s4] sm:$0x1]
        %v385 = vlaneseq
        %v386 = vshrl.u32 %v385, 7
        %v387 = vsub.s32 0, %v386
        %v388 = vrot.slane %v384, %v387
        %v389 = vmul.f32 %v354, %v388
        %v390 = vmul.f32 %v357, %v388
        %v391 = vmul.f32 %v362, %v388
        %v392 = vmul.f32 %v365, %v388
        %v393 = vmul.f32 %v370, %v388
        %v394 = vmul.f32 %v373, %v388
        %v395 = vmul.f32 %v378, %v388
        %v396 = vmul.f32 %v381, %v388
        %v397 = vld [vmem:[%s4 + $0x1] sm:$0x1]
        %v398 = vlaneseq
        %v399 = vshrl.u32 %v398, 7
        %v400 = vsub.s32 0, %v399
        %v401 = vrot.slane %v397, %v400
        %v402 = vadd.f32 %v389, %v401
        %v403 = vadd.f32 %v390, %v401
        %v404 = vadd.f32 %v391, %v401
        %v405 = vadd.f32 %v392, %v401
        %v406 = vadd.f32 %v393, %v401
        %v407 = vadd.f32 %v394, %v401
        %v408 = vadd.f32 %v395, %v401
        %v409 = vadd.f32 %v396, %v401
        %v410 = vmax.f32 %v402, 0.0
        %v411 = vmax.f32 %v403, 0.0
        %v412 = vmax.f32 %v404, 0.0
        %v413 = vmax.f32 %v405, 0.0
        %v414 = vmax.f32 %v406, 0.0
        %v415 = vmax.f32 %v407, 0.0
        %v416 = vmax.f32 %v408, 0.0
        %v417 = vmax.f32 %v409, 0.0
        %vm418 = vcmask 64512
        %419 = vst.msk [vmem:[#allocation2] sm:$0xff] %vm418, 0.0
        %vm420 = vcmask 58368
        %421 = vst.msk [vmem:[#allocation2 + $0x8] sm:$0x3] %vm420, 0.0
        %422 = vst.msk [vmem:[#allocation2 + $0x10] sm:$0xff] %vm418, 0.0
        %423 = vst.msk [vmem:[#allocation2 + $0x18] sm:$0x3] %vm420, 0.0
        %424 = vst.msk [vmem:[#allocation2 + $0x20] sm:$0xff] %vm418, 0.0
        %425 = vst.msk [vmem:[#allocation2 + $0x28] sm:$0x3] %vm420, 0.0
        %426 = vst.msk [vmem:[#allocation2 + $0x30] sm:$0xff] %vm418, 0.0
        %427 = vst.msk [vmem:[#allocation2 + $0x38] sm:$0x3] %vm420, 0.0
        %428 = vst.msk [vmem:[#allocation2 + $0x40] sm:$0xff] %vm418, 0.0
        %429 = vst.msk [vmem:[#allocation2 + $0x48] sm:$0x3] %vm420, 0.0
        %430 = vst.msk [vmem:[#allocation2 + $0x50] sm:$0xff] %vm418, 0.0
        %431 = vst.msk [vmem:[#allocation2 + $0x58] sm:$0x3] %vm420, 0.0
        %432 = vst.msk [vmem:[#allocation2 + $0x60] sm:$0xff] %vm418, 0.0
        %433 = vst.msk [vmem:[#allocation2 + $0x68] sm:$0x3] %vm420, 0.0
        %434 = vst.msk [vmem:[#allocation2 + $0x70] sm:$0xff] %vm418, 0.0
        %435 = vst.msk [vmem:[#allocation2 + $0x78] sm:$0x3] %vm420, 0.0
        %436 = vst.msk [vmem:[#allocation2 + $0x80] sm:$0xff] %vm418, 0.0
        %437 = vst.msk [vmem:[#allocation2 + $0x88] sm:$0x3] %vm420, 0.0
        %438 = vst.msk [vmem:[#allocation2 + $0x90] sm:$0xff] %vm418, 0.0
        %439 = vst.msk [vmem:[#allocation2 + $0x98] sm:$0x3] %vm420, 0.0
        %s440 = scalar_lea.vmem [#allocation2], 16
        %441 = vst.msk [vmem:[%s440 + $0x1] sm:$0xff] %vm418, %v410
        %442 = vst.msk [vmem:[%s440 + $0x11] sm:$0xff] %vm418, %v411
        %443 = vst.msk [vmem:[%s440 + $0x21] sm:$0xff] %vm418, %v412
        %444 = vst.msk [vmem:[%s440 + $0x31] sm:$0xff] %vm418, %v413
        %445 = vst.msk [vmem:[%s440 + $0x41] sm:$0xff] %vm418, %v414
        %446 = vst.msk [vmem:[%s440 + $0x51] sm:$0xff] %vm418, %v415
        %447 = vst.msk [vmem:[%s440 + $0x61] sm:$0xff] %vm418, %v416
        %448 = vst.msk [vmem:[%s440 + $0x71] sm:$0xff] %vm418, %v417
        %v449 = vld [vmem:[#allocation2] sm:$0xff]
        %v450 = vld [vmem:[#allocation2 + $0x8] sm:$0x3]
        %v451 = vld [vmem:[#allocation2 + $0x10] sm:$0xff]
        %v452 = vld [vmem:[#allocation2 + $0x18] sm:$0x3]
        %v453 = vld [vmem:[#allocation2 + $0x20] sm:$0xff]
        %v454 = vld [vmem:[#allocation2 + $0x28] sm:$0x3]
        %v455 = vld [vmem:[#allocation2 + $0x30] sm:$0xff]
        %v456 = vld [vmem:[#allocation2 + $0x38] sm:$0x3]
        %v457 = vld [vmem:[#allocation2 + $0x40] sm:$0xff]
        %v458 = vld [vmem:[#allocation2 + $0x48] sm:$0x3]
        %v459 = vld [vmem:[#allocation2 + $0x50] sm:$0xff]
        %v460 = vld [vmem:[#allocation2 + $0x58] sm:$0x3]
        %v461 = vld [vmem:[#allocation2 + $0x60] sm:$0xff]
        %v462 = vld [vmem:[#allocation2 + $0x68] sm:$0x3]
        %v463 = vld [vmem:[#allocation2 + $0x70] sm:$0xff]
        %v464 = vld [vmem:[#allocation2 + $0x78] sm:$0x3]
        %v465 = vld [vmem:[#allocation2 + $0x80] sm:$0xff]
        %v466 = vld [vmem:[#allocation2 + $0x88] sm:$0x3]
        %v467 = vld [vmem:[#allocation2 + $0x90] sm:$0xff]
        %v468 = vld [vmem:[#allocation2 + $0x98] sm:$0x3]
        %vm485 = vcmask 1046528
        %v486 = vrot.slane %v449, 1
        %v487 = vrot.slane %v450, 1
        %v488 = vsel %vm485, %v486, %v487
        %v489 = vrot.slane %v451, 1
        %v490 = vrot.slane %v452, 1
        %v491 = vsel %vm485, %v489, %v490
        %v492 = vrot.slane %v453, 1
        %v493 = vrot.slane %v454, 1
        %v494 = vsel %vm485, %v492, %v493
        %v495 = vrot.slane %v455, 1
        %v496 = vrot.slane %v456, 1
        %v497 = vsel %vm485, %v495, %v496
        %v498 = vrot.slane %v457, 1
        %v499 = vrot.slane %v458, 1
        %v500 = vsel %vm485, %v498, %v499
        %v501 = vrot.slane %v459, 1
        %v502 = vrot.slane %v460, 1
        %v503 = vsel %vm485, %v501, %v502
        %v504 = vrot.slane %v461, 1
        %v505 = vrot.slane %v462, 1
        %v506 = vsel %vm485, %v504, %v505
        %v507 = vrot.slane %v463, 1
        %v508 = vrot.slane %v464, 1
        %v509 = vsel %vm485, %v507, %v508
        %510 = vrot.lane.b32.xlu0 %v488, 8
        %v511 = vpop.permute.xlu0 %510
        %512 = vrot.lane.b32.xlu0 %v491, 8
        %v513 = vpop.permute.xlu0 %512
        %514 = vrot.lane.b32.xlu0 %v494, 8
        %v515 = vpop.permute.xlu0 %514
        %516 = vrot.lane.b32.xlu0 %v497, 8
        %v517 = vpop.permute.xlu0 %516
        %518 = vrot.lane.b32.xlu0 %v500, 8
        %v519 = vpop.permute.xlu0 %518
        %520 = vrot.lane.b32.xlu0 %v503, 8
        %v521 = vpop.permute.xlu0 %520
        %522 = vrot.lane.b32.xlu0 %v506, 8
        %v523 = vpop.permute.xlu0 %522
        %524 = vrot.lane.b32.xlu0 %v509, 8
        %v525 = vpop.permute.xlu0 %524
        %vm534 = vcmask 1045504
        %v535 = vrot.slane %v449, 2
        %v536 = vrot.slane %v450, 2
        %v537 = vsel %vm534, %v535, %v536
        %v538 = vrot.slane %v451, 2
        %v539 = vrot.slane %v452, 2
        %v540 = vsel %vm534, %v538, %v539
        %v541 = vrot.slane %v453, 2
        %v542 = vrot.slane %v454, 2
        %v543 = vsel %vm534, %v541, %v542
        %v544 = vrot.slane %v455, 2
        %v545 = vrot.slane %v456, 2
        %v546 = vsel %vm534, %v544, %v545
        %v547 = vrot.slane %v457, 2
        %v548 = vrot.slane %v458, 2
        %v549 = vsel %vm534, %v547, %v548
        %v550 = vrot.slane %v459, 2
        %v551 = vrot.slane %v460, 2
        %v552 = vsel %vm534, %v550, %v551
        %v553 = vrot.slane %v461, 2
        %v554 = vrot.slane %v462, 2
        %v555 = vsel %vm534, %v553, %v554
        %v556 = vrot.slane %v463, 2
        %v557 = vrot.slane %v464, 2
        %v558 = vsel %vm534, %v556, %v557
        %559 = vrot.lane.b32.xlu0 %v537, 16
        %v560 = vpop.permute.xlu0 %559
        %561 = vrot.lane.b32.xlu0 %v540, 16
        %v562 = vpop.permute.xlu0 %561
        %563 = vrot.lane.b32.xlu0 %v543, 16
        %v564 = vpop.permute.xlu0 %563
        %565 = vrot.lane.b32.xlu0 %v546, 16
        %v566 = vpop.permute.xlu0 %565
        %567 = vrot.lane.b32.xlu0 %v549, 16
        %v568 = vpop.permute.xlu0 %567
        %569 = vrot.lane.b32.xlu0 %v552, 16
        %v570 = vpop.permute.xlu0 %569
        %571 = vrot.lane.b32.xlu0 %v555, 16
        %v572 = vpop.permute.xlu0 %571
        %573 = vrot.lane.b32.xlu0 %v558, 16
        %v574 = vpop.permute.xlu0 %573
        %v583 = vsel %vm418, %v449, %v511
        %v584 = vsel %vm418, %v451, %v513
        %v585 = vsel %vm418, %v453, %v515
        %v586 = vsel %vm418, %v455, %v517
        %v587 = vsel %vm418, %v457, %v519
        %v588 = vsel %vm418, %v459, %v521
        %v589 = vsel %vm418, %v461, %v523
        %v590 = vsel %vm418, %v463, %v525
        %vm591 = vcmask 130048
        %v592 = vsel %vm591, %v583, %v560
        %v593 = vsel %vm591, %v584, %v562
        %v594 = vsel %vm591, %v585, %v564
        %v595 = vsel %vm591, %v586, %v566
        %v596 = vsel %vm591, %v587, %v568
        %v597 = vsel %vm591, %v588, %v570
        %v598 = vsel %vm591, %v589, %v572
        %v599 = vsel %vm591, %v590, %v574
        %v600 = vpack.c.bf16 %v593, %v592
        %v601 = vpack.c.bf16 %v595, %v594
        %v602 = vpack.c.bf16 %v597, %v596
        %v603 = vpack.c.bf16 %v599, %v598
        %v604 = vld [vmem:[%s2] sm:$0xf]
        %v605 = vld [vmem:[%s2 + $0x4] sm:$0xf]
        %v606 = vld [vmem:[%s2 + $0x8] sm:$0xf]
        %v609 = vrot.slane %v465, 1
        %v610 = vrot.slane %v466, 1
        %v611 = vsel %vm485, %v609, %v610
        %612 = vrot.lane.b32.xlu0 %v611, 8
        %v613 = vpop.permute.xlu0 %612
        %v615 = vrot.slane %v465, 2
        %v616 = vrot.slane %v466, 2
        %v617 = vsel %vm534, %v615, %v616
        %618 = vrot.lane.b32.xlu0 %v617, 16
        %v619 = vpop.permute.xlu0 %618
        %v621 = vsel %vm418, %v465, %v613
        %v622 = vsel %vm591, %v621, %v619
        %v623 = vpack.c.bf16 %v594, %v593
        %v624 = vpack.c.bf16 %v596, %v595
        %v625 = vpack.c.bf16 %v598, %v597
        %v626 = vpack.c.bf16 %v622, %v599
        %s627 = scalar_lea.vmem %s2, 12
        %v628 = vld [vmem:[%s627] sm:$0xf]
        %v629 = vld [vmem:[%s627 + $0x4] sm:$0xf]
        %v630 = vld [vmem:[%s627 + $0x8] sm:$0xf]
        %v634 = vunpack.c.l.b16 %v628
        %v635 = vunpack.c.l.b16 %v629
        %v636 = vunpack.c.l.b16 %v630
        %v637 = vpack.c.b16 %v635, %v634
        %v638 = vpack.c.b16 %v636, %v636
        %vm640 = vcmask 195584
        %v642 = vsel %vm640, %v623, 0
        %v645 = vsel %vm640, %v624, 0
        %v648 = vsel %vm640, %v625, 0
        %v651 = vsel %vm640, %v626, 0
        %vm653 = vcmask 1043456
        %v655 = vsel %vm653, %v638, 0
        %657 = vmatprep.subr.bf16.mxu0 0
        %658 = vmatpush1.bf16.msra.mxu0 %v637
        %659 = vmatprep.subr.bf16.mxu0 0
        %660 = vmatpush1.bf16.msra.mxu0 %v655
        %661 = vmatprep.subr.bf16.mxu0 0
        %662 = vmatpush1.bf16.msra.mxu0 0
        %663 = vmatprep.subr.bf16.mxu0 0
        %664 = vmatpush1.bf16.msra.mxu0 0
        %665 = vmatprep.subr.bf16.mxu0 0
        %666 = vmatpush1.bf16.msra.mxu0 0
        %667 = vmatprep.subr.bf16.mxu0 0
        %668 = vmatpush1.bf16.msra.mxu0 0
        %669 = vmatprep.subr.bf16.mxu0 0
        %670 = vmatpush1.bf16.msra.mxu0 0
        %671 = vmatprep.subr.bf16.mxu0 0
        %672 = vmatpush1.bf16.msra.mxu0 0
        %673 = vmatprep.subr.bf16.mxu0 0
        %674 = vmatpush1.bf16.msra.mxu0 0
        %675 = vmatprep.subr.bf16.mxu0 0
        %676 = vmatpush1.bf16.msra.mxu0 0
        %677 = vmatprep.subr.bf16.mxu0 0
        %678 = vmatpush1.bf16.msra.mxu0 0
        %679 = vmatprep.subr.bf16.mxu0 0
        %680 = vmatpush1.bf16.msra.mxu0 0
        %681 = vmatprep.subr.bf16.mxu0 0
        %682 = vmatpush1.bf16.msra.mxu0 0
        %683 = vmatprep.subr.bf16.mxu0 0
        %684 = vmatpush1.bf16.msra.mxu0 0
        %685 = vmatprep.subr.bf16.mxu0 0
        %686 = vmatpush1.bf16.msra.mxu0 0
        %687 = vmatprep.subr.bf16.mxu0 0
        %688 = vmatpush1.bf16.msra.mxu0 0
        %689 = vmatprep.mubr.bf16.mxu0 0
        %690 = vmatmul.mubr.bf16.gmra.mrb[0].mxu0 %v642
        %v691 = vpop.f32.mrb[0].mxu0
        %v692 = vadd.f32 0.0, %v691
        %v693 = vpop.f32.mrb[0].mxu0
        %v694 = vpop.f32.mrb[0].mxu0
        %v695 = vadd.f32 0.0, %v694
        %v696 = vpop.f32.mrb[0].mxu0
        %697 = vmatprep.mubr.bf16.mxu0 0
        %698 = vmatmul.mubr.bf16.gmra.mrb[0].mxu0 %v645
        %v699 = vpop.f32.mrb[0].mxu0
        %v700 = vadd.f32 0.0, %v699
        %v701 = vpop.f32.mrb[0].mxu0
        %v702 = vpop.f32.mrb[0].mxu0
        %v703 = vadd.f32 0.0, %v702
        %v704 = vpop.f32.mrb[0].mxu0
        %705 = vmatprep.mubr.bf16.mxu0 0
        %706 = vmatmul.mubr.bf16.gmra.mrb[0].mxu0 %v648
        %v707 = vpop.f32.mrb[0].mxu0
        %v708 = vadd.f32 0.0, %v707
        %v709 = vpop.f32.mrb[0].mxu0
        %v710 = vpop.f32.mrb[0].mxu0
        %v711 = vadd.f32 0.0, %v710
        %v712 = vpop.f32.mrb[0].mxu0
        %713 = vmatprep.mubr.bf16.mxu0 0
        %714 = vmatmul.mubr.bf16.gmra.mrb[0].mxu0 %v651
        %v715 = vpop.f32.mrb[0].mxu0
        %v716 = vadd.f32 0.0, %v715
        %v717 = vpop.f32.mrb[0].mxu0
        %v718 = vpop.f32.mrb[0].mxu0
        %v719 = vadd.f32 0.0, %v718
        %v720 = vpop.f32.mrb[0].mxu0
        %721 = vdwg.mxu0
        %v725 = vunpack.c.l.b16 %v604
        %v726 = vunpack.c.l.b16 %v605
        %v727 = vunpack.c.l.b16 %v606
        %v728 = vpack.c.b16 %v726, %v725
        %v729 = vpack.c.b16 %v727, %v727
        %v732 = vsel %vm640, %v600, 0
        %v735 = vsel %vm640, %v601, 0
        %v738 = vsel %vm640, %v602, 0
        %v741 = vsel %vm640, %v603, 0
        %v744 = vsel %vm653, %v729, 0
        %746 = vmatprep.subr.bf16.mxu0 0
        %747 = vmatpush1.bf16.msra.mxu0 %v728
        %748 = vmatprep.subr.bf16.mxu0 0
        %749 = vmatpush1.bf16.msra.mxu0 %v744
        %750 = vmatprep.subr.bf16.mxu0 0
        %751 = vmatpush1.bf16.msra.mxu0 0
        %752 = vmatprep.subr.bf16.mxu0 0
        %753 = vmatpush1.bf16.msra.mxu0 0
        %754 = vmatprep.subr.bf16.mxu0 0
        %755 = vmatpush1.bf16.msra.mxu0 0
        %756 = vmatprep.subr.bf16.mxu0 0
        %757 = vmatpush1.bf16.msra.mxu0 0
        %758 = vmatprep.subr.bf16.mxu0 0
        %759 = vmatpush1.bf16.msra.mxu0 0
        %760 = vmatprep.subr.bf16.mxu0 0
        %761 = vmatpush1.bf16.msra.mxu0 0
        %762 = vmatprep.subr.bf16.mxu0 0
        %763 = vmatpush1.bf16.msra.mxu0 0
        %764 = vmatprep.subr.bf16.mxu0 0
        %765 = vmatpush1.bf16.msra.mxu0 0
        %766 = vmatprep.subr.bf16.mxu0 0
        %767 = vmatpush1.bf16.msra.mxu0 0
        %768 = vmatprep.subr.bf16.mxu0 0
        %769 = vmatpush1.bf16.msra.mxu0 0
        %770 = vmatprep.subr.bf16.mxu0 0
        %771 = vmatpush1.bf16.msra.mxu0 0
        %772 = vmatprep.subr.bf16.mxu0 0
        %773 = vmatpush1.bf16.msra.mxu0 0
        %774 = vmatprep.subr.bf16.mxu0 0
        %775 = vmatpush1.bf16.msra.mxu0 0
        %776 = vmatprep.subr.bf16.mxu0 0
        %777 = vmatpush1.bf16.msra.mxu0 0
        %778 = vmatprep.mubr.bf16.mxu0 0
        %779 = vmatmul.mubr.bf16.gmra.mrb[0].mxu0 %v732
        %v780 = vpop.f32.mrb[0].mxu0
        %v781 = vadd.f32 %v692, %v780
        %v782 = vpop.f32.mrb[0].mxu0
        %v783 = vpop.f32.mrb[0].mxu0
        %v784 = vadd.f32 %v695, %v783
        %v785 = vpop.f32.mrb[0].mxu0
        %786 = vmatprep.mubr.bf16.mxu0 0
        %787 = vmatmul.mubr.bf16.gmra.mrb[0].mxu0 %v735
        %v788 = vpop.f32.mrb[0].mxu0
        %v789 = vadd.f32 %v700, %v788
        %v790 = vpop.f32.mrb[0].mxu0
        %v791 = vpop.f32.mrb[0].mxu0
        %v792 = vadd.f32 %v703, %v791
        %v793 = vpop.f32.mrb[0].mxu0
        %794 = vmatprep.mubr.bf16.mxu0 0
        %795 = vmatmul.mubr.bf16.gmra.mrb[0].mxu0 %v738
        %v796 = vpop.f32.mrb[0].mxu0
        %v797 = vadd.f32 %v708, %v796
        %v798 = vpop.f32.mrb[0].mxu0
        %v799 = vpop.f32.mrb[0].mxu0
        %v800 = vadd.f32 %v711, %v799
        %v801 = vpop.f32.mrb[0].mxu0
        %802 = vmatprep.mubr.bf16.mxu0 0
        %803 = vmatmul.mubr.bf16.gmra.mrb[0].mxu0 %v741
        %v804 = vpop.f32.mrb[0].mxu0
        %v805 = vadd.f32 %v716, %v804
        %v806 = vpop.f32.mrb[0].mxu0
        %v807 = vpop.f32.mrb[0].mxu0
        %v808 = vadd.f32 %v719, %v807
        %v809 = vpop.f32.mrb[0].mxu0
        %810 = vdwg.mxu0
        %v813 = vrot.slane %v467, 1
        %v814 = vrot.slane %v468, 1
        %v815 = vsel %vm485, %v813, %v814
        %816 = vrot.lane.b32.xlu0 %v815, 8
        %v817 = vpop.permute.xlu0 %816
        %v819 = vrot.slane %v467, 2
        %v820 = vrot.slane %v468, 2
        %v821 = vsel %vm534, %v819, %v820
        %822 = vrot.lane.b32.xlu0 %v821, 16
        %v823 = vpop.permute.xlu0 %822
        %v825 = vsel %vm418, %v467, %v817
        %v826 = vsel %vm591, %v825, %v823
        %v827 = vpack.c.bf16 %v826, %v622
        %s828 = scalar_lea.vmem %s2, 24
        %v829 = vld [vmem:[%s828] sm:$0xf]
        %v830 = vld [vmem:[%s828 + $0x4] sm:$0xf]
        %v831 = vld [vmem:[%s828 + $0x8] sm:$0xf]
        %v835 = vunpack.c.l.b16 %v829
        %v836 = vunpack.c.l.b16 %v830
        %v837 = vunpack.c.l.b16 %v831
        %v838 = vpack.c.b16 %v836, %v835
        %v839 = vpack.c.b16 %v837, %v837
        %v842 = vsel %vm640, %v827, 0
        %v845 = vsel %vm653, %v839, 0
        %847 = vmatprep.subr.bf16.mxu0 0
        %848 = vmatpush1.bf16.msra.mxu0 %v838
        %849 = vmatprep.subr.bf16.mxu0 0
        %850 = vmatpush1.bf16.msra.mxu0 %v845
        %851 = vmatprep.subr.bf16.mxu0 0
        %852 = vmatpush1.bf16.msra.mxu0 0
        %853 = vmatprep.subr.bf16.mxu0 0
        %854 = vmatpush1.bf16.msra.mxu0 0
        %855 = vmatprep.subr.bf16.mxu0 0
        %856 = vmatpush1.bf16.msra.mxu0 0
        %857 = vmatprep.subr.bf16.mxu0 0
        %858 = vmatpush1.bf16.msra.mxu0 0
        %859 = vmatprep.subr.bf16.mxu0 0
        %860 = vmatpush1.bf16.msra.mxu0 0
        %861 = vmatprep.subr.bf16.mxu0 0
        %862 = vmatpush1.bf16.msra.mxu0 0
        %863 = vmatprep.subr.bf16.mxu0 0
        %864 = vmatpush1.bf16.msra.mxu0 0
        %865 = vmatprep.subr.bf16.mxu0 0
        %866 = vmatpush1.bf16.msra.mxu0 0
        %867 = vmatprep.subr.bf16.mxu0 0
        %868 = vmatpush1.bf16.msra.mxu0 0
        %869 = vmatprep.subr.bf16.mxu0 0
        %870 = vmatpush1.bf16.msra.mxu0 0
        %871 = vmatprep.subr.bf16.mxu0 0
        %872 = vmatpush1.bf16.msra.mxu0 0
        %873 = vmatprep.subr.bf16.mxu0 0
        %874 = vmatpush1.bf16.msra.mxu0 0
        %875 = vmatprep.subr.bf16.mxu0 0
        %876 = vmatpush1.bf16.msra.mxu0 0
        %877 = vmatprep.subr.bf16.mxu0 0
        %878 = vmatpush1.bf16.msra.mxu0 0
        %879 = vmatprep.mubr.bf16.mxu0 0
        %880 = vmatmul.mubr.bf16.gmra.mrb[0].mxu0 %v735
        %v881 = vpop.f32.mrb[0].mxu0
        %v882 = vadd.f32 0.0, %v881
        %v883 = vpop.f32.mrb[0].mxu0
        %v884 = vpop.f32.mrb[0].mxu0
        %v885 = vadd.f32 0.0, %v884
        %v886 = vpop.f32.mrb[0].mxu0
        %887 = vmatprep.mubr.bf16.mxu0 0
        %888 = vmatmul.mubr.bf16.gmra.mrb[0].mxu0 %v738
        %v889 = vpop.f32.mrb[0].mxu0
        %v890 = vadd.f32 0.0, %v889
        %v891 = vpop.f32.mrb[0].mxu0
        %v892 = vpop.f32.mrb[0].mxu0
        %v893 = vadd.f32 0.0, %v892
        %v894 = vpop.f32.mrb[0].mxu0
        %895 = vmatprep.mubr.bf16.mxu0 0
        %896 = vmatmul.mubr.bf16.gmra.mrb[0].mxu0 %v741
        %v897 = vpop.f32.mrb[0].mxu0
        %v898 = vadd.f32 0.0, %v897
        %v899 = vpop.f32.mrb[0].mxu0
        %v900 = vpop.f32.mrb[0].mxu0
        %v901 = vadd.f32 0.0, %v900
        %v902 = vpop.f32.mrb[0].mxu0
        %903 = vmatprep.mubr.bf16.mxu0 0
        %904 = vmatmul.mubr.bf16.gmra.mrb[0].mxu0 %v842
        %v905 = vpop.f32.mrb[0].mxu0
        %v906 = vadd.f32 0.0, %v905
        %v907 = vpop.f32.mrb[0].mxu0
        %v908 = vpop.f32.mrb[0].mxu0
        %v909 = vadd.f32 0.0, %v908
        %v910 = vpop.f32.mrb[0].mxu0
        %911 = vdwg.mxu0
        %v912 = vadd.f32 %v781, %v882
        %v913 = vadd.f32 %v784, %v885
        %v914 = vadd.f32 %v789, %v890
        %v915 = vadd.f32 %v792, %v893
        %v916 = vadd.f32 %v797, %v898
        %v917 = vadd.f32 %v800, %v901
        %v918 = vadd.f32 %v805, %v906
        %v919 = vadd.f32 %v808, %v909
        %v920 = vld [vmem:[%s5] sm:$0x1]
        %v921 = vlaneseq
        %v922 = vshrl.u32 %v921, 7
        %v923 = vsub.s32 0, %v922
        %v924 = vrot.slane %v920, %v923
        %v925 = vmul.f32 %v912, %v924
        %v926 = vmul.f32 %v913, %v924
        %v927 = vmul.f32 %v914, %v924
        %v928 = vmul.f32 %v915, %v924
        %v929 = vmul.f32 %v916, %v924
        %v930 = vmul.f32 %v917, %v924
        %v931 = vmul.f32 %v918, %v924
        %v932 = vmul.f32 %v919, %v924
        %v933 = vld [vmem:[%s5 + $0x1] sm:$0x1]
        %v934 = vlaneseq
        %v935 = vshrl.u32 %v934, 7
        %v936 = vsub.s32 0, %v935
        %v937 = vrot.slane %v933, %v936
        %v938 = vadd.f32 %v925, %v937
        %v939 = vadd.f32 %v926, %v937
        %v940 = vadd.f32 %v927, %v937
        %v941 = vadd.f32 %v928, %v937
        %v942 = vadd.f32 %v929, %v937
        %v943 = vadd.f32 %v930, %v937
        %v944 = vadd.f32 %v931, %v937
        %v945 = vadd.f32 %v932, %v937
        %v946 = vmax.f32 %v938, 0.0
        %v947 = vmax.f32 %v939, 0.0
        %v948 = vmax.f32 %v940, 0.0
        %v949 = vmax.f32 %v941, 0.0
        %v950 = vmax.f32 %v942, 0.0
        %v951 = vmax.f32 %v943, 0.0
        %v952 = vmax.f32 %v944, 0.0
        %v953 = vmax.f32 %v945, 0.0
        %v954 = vpack.c.bf16 %v947, %v946
        %v955 = vpack.c.bf16 %v949, %v948
        %v956 = vpack.c.bf16 %v951, %v950
        %v957 = vpack.c.bf16 %v953, %v952
        %v958 = vld [vmem:[%s3] sm:$0xf]
        %v960 = vsel %vm418, %v954, 0
        %v963 = vsel %vm418, %v955, 0
        %v966 = vsel %vm418, %v956, 0
        %v969 = vsel %vm418, %v957, 0
        %v972 = vsel %vm653, %v958, 0
        %974 = vmatprep.subr.bf16.mxu0 0
        %975 = vmatpush1.bf16.msra.mxu0 %v972
        %976 = vmatprep.subr.bf16.mxu0 0
        %977 = vmatpush1.bf16.msra.mxu0 0
        %978 = vmatprep.subr.bf16.mxu0 0
        %979 = vmatpush1.bf16.msra.mxu0 0
        %980 = vmatprep.subr.bf16.mxu0 0
        %981 = vmatpush1.bf16.msra.mxu0 0
        %982 = vmatprep.subr.bf16.mxu0 0
        %983 = vmatpush1.bf16.msra.mxu0 0
        %984 = vmatprep.subr.bf16.mxu0 0
        %985 = vmatpush1.bf16.msra.mxu0 0
        %986 = vmatprep.subr.bf16.mxu0 0
        %987 = vmatpush1.bf16.msra.mxu0 0
        %988 = vmatprep.subr.bf16.mxu0 0
        %989 = vmatpush1.bf16.msra.mxu0 0
        %990 = vmatprep.subr.bf16.mxu0 0
        %991 = vmatpush1.bf16.msra.mxu0 0
        %992 = vmatprep.subr.bf16.mxu0 0
        %993 = vmatpush1.bf16.msra.mxu0 0
        %994 = vmatprep.subr.bf16.mxu0 0
        %995 = vmatpush1.bf16.msra.mxu0 0
        %996 = vmatprep.subr.bf16.mxu0 0
        %997 = vmatpush1.bf16.msra.mxu0 0
        %998 = vmatprep.subr.bf16.mxu0 0
        %999 = vmatpush1.bf16.msra.mxu0 0
        %1000 = vmatprep.subr.bf16.mxu0 0
        %1001 = vmatpush1.bf16.msra.mxu0 0
        %1002 = vmatprep.subr.bf16.mxu0 0
        %1003 = vmatpush1.bf16.msra.mxu0 0
        %1004 = vmatprep.subr.bf16.mxu0 0
        %1005 = vmatpush1.bf16.msra.mxu0 0
        %1006 = vmatprep.mubr.bf16.mxu0 0
        %1007 = vmatmul.mubr.bf16.gmra.mrb[0].mxu0 %v960
        %v1008 = vpop.f32.mrb[0].mxu0
        %v1009 = vadd.f32 0.0, %v1008
        %v1010 = vpop.f32.mrb[0].mxu0
        %v1011 = vpop.f32.mrb[0].mxu0
        %v1012 = vadd.f32 0.0, %v1011
        %v1013 = vpop.f32.mrb[0].mxu0
        %1014 = vmatprep.mubr.bf16.mxu0 0
        %1015 = vmatmul.mubr.bf16.gmra.mrb[0].mxu0 %v963
        %v1016 = vpop.f32.mrb[0].mxu0
        %v1017 = vadd.f32 0.0, %v1016
        %v1018 = vpop.f32.mrb[0].mxu0
        %v1019 = vpop.f32.mrb[0].mxu0
        %v1020 = vadd.f32 0.0, %v1019
        %v1021 = vpop.f32.mrb[0].mxu0
        %1022 = vmatprep.mubr.bf16.mxu0 0
        %1023 = vmatmul.mubr.bf16.gmra.mrb[0].mxu0 %v966
        %v1024 = vpop.f32.mrb[0].mxu0
        %v1025 = vadd.f32 0.0, %v1024
        %v1026 = vpop.f32.mrb[0].mxu0
        %v1027 = vpop.f32.mrb[0].mxu0
        %v1028 = vadd.f32 0.0, %v1027
        %v1029 = vpop.f32.mrb[0].mxu0
        %1030 = vmatprep.mubr.bf16.mxu0 0
        %1031 = vmatmul.mubr.bf16.gmra.mrb[0].mxu0 %v969
        %v1032 = vpop.f32.mrb[0].mxu0
        %v1033 = vadd.f32 0.0, %v1032
        %v1034 = vpop.f32.mrb[0].mxu0
        %v1035 = vpop.f32.mrb[0].mxu0
        %v1036 = vadd.f32 0.0, %v1035
        %v1037 = vpop.f32.mrb[0].mxu0
        %1038 = vdwg.mxu0
        %v1039 = vld [vmem:[%s6] sm:$0x1]
        %v1040 = vlaneseq
        %v1041 = vshrl.u32 %v1040, 7
        %v1042 = vsub.s32 0, %v1041
        %v1043 = vrot.slane %v1039, %v1042
        %v1044 = vmul.f32 %v1009, %v1043
        %v1045 = vmul.f32 %v1012, %v1043
        %v1046 = vmul.f32 %v1017, %v1043
        %v1047 = vmul.f32 %v1020, %v1043
        %v1048 = vmul.f32 %v1025, %v1043
        %v1049 = vmul.f32 %v1028, %v1043
        %v1050 = vmul.f32 %v1033, %v1043
        %v1051 = vmul.f32 %v1036, %v1043
        %v1052 = vld [vmem:[%s6 + $0x1] sm:$0x1]
        %v1053 = vlaneseq
        %v1054 = vshrl.u32 %v1053, 7
        %v1055 = vsub.s32 0, %v1054
        %v1056 = vrot.slane %v1052, %v1055
        %v1057 = vadd.f32 %v1044, %v1056
        %v1058 = vadd.f32 %v1045, %v1056
        %v1059 = vadd.f32 %v1046, %v1056
        %v1060 = vadd.f32 %v1047, %v1056
        %v1061 = vadd.f32 %v1048, %v1056
        %v1062 = vadd.f32 %v1049, %v1056
        %v1063 = vadd.f32 %v1050, %v1056
        %v1064 = vadd.f32 %v1051, %v1056
        %v1065 = vadd.f32 %v1057, %v278
        %v1066 = vadd.f32 %v1058, %v279
        %v1067 = vadd.f32 %v1059, %v280
        %v1068 = vadd.f32 %v1060, %v281
        %v1069 = vadd.f32 %v1061, %v282
        %v1070 = vadd.f32 %v1062, %v283
        %v1071 = vadd.f32 %v1063, %v284
        %v1072 = vadd.f32 %v1064, %v285
        %v1073 = vmax.f32 %v1065, 0.0
        %v1074 = vmax.f32 %v1066, 0.0
        %v1075 = vmax.f32 %v1067, 0.0
        %v1076 = vmax.f32 %v1068, 0.0
        %v1077 = vmax.f32 %v1069, 0.0
        %v1078 = vmax.f32 %v1070, 0.0
        %v1079 = vmax.f32 %v1071, 0.0
        %v1080 = vmax.f32 %v1072, 0.0
        %1081 = vst.msk [vmem:[%s271] sm:$0xff] %vm306, %v1073
        %1082 = vst.msk [vmem:[%s271 + $0x8] sm:$0xff] %vm306, %v1074
        %1083 = vst.msk [vmem:[%s271 + $0x10] sm:$0xff] %vm306, %v1075
        %1084 = vst.msk [vmem:[%s271 + $0x18] sm:$0xff] %vm306, %v1076
        %1085 = vst.msk [vmem:[%s271 + $0x20] sm:$0xff] %vm306, %v1077
        %1086 = vst.msk [vmem:[%s271 + $0x28] sm:$0xff] %vm306, %v1078
        %1087 = vst.msk [vmem:[%s271 + $0x30] sm:$0xff] %vm306, %v1079
        %1088 = vst.msk [vmem:[%s271 + $0x38] sm:$0xff] %vm306, %v1080
        %s1089 = sand.u32 %s181, 1
        %s1090 = scalar_lea.sflag [#allocation4], %s1089
        %s1091 = sand.u32 %s181, 1
        %s1092 = smul.addr %s1091, 64
        %s1093 = scalar_lea.vmem [#allocation3], %s1092
        // Predicated region
        $region49: #{bottleneck_forward.1} parent=47 // pred_check
          %p1094 = pneg %p191
        $region50: #{bottleneck_forward.1} parent=47 // pred_check_branch
          %1096 = sbr.rel (%p1094) target = $region52
        $region51: #{bottleneck_forward.1} parent=47 // pred_region
          %s1098 = ssub.s32 1024, 1024
          %1099 = vsyncadd %s1090, %s1098
          %s1100 = smul.addr %s21, 8
          %s1101 = smul.addr %s1100, 128
          %s1102 = scalar_lea.hbm %s7, %s1101
          %s1103 = sshll.u32 %s1093, 4
          %s1104 = int_to_ptr.vmem [resolvable:$true] %s1103
          %1109 = dma.vmem_to_hbm [thread:$0]  %s1104, 1024, %s1102, %s1090, 128, 128, 8
        $region52: #{bottleneck_forward.1} parent=47 // pred_fallthru
          _
      $region48: #{bottleneck_forward.1} parent=5 // pred_fallthru
        _
      %p1110 = scmp.le.s32.totalorder 2, %s16
      // Predicated region
      $region53: #{bottleneck_forward.1} parent=5 // pred_check
        %p1111 = pneg %p1110
      $region54: #{bottleneck_forward.1} parent=5 // pred_check_branch
        %1113 = sbr.rel (%p1111) target = $region56
      $region55: #{bottleneck_forward.1} parent=5 // pred_region
        %s1114 = ssub.s32 %s16, 2
        // Predicated region
        $region57: #{bottleneck_forward.1} parent=55 // pred_check
          %p1115 = pneg %p197
        $region58: #{bottleneck_forward.1} parent=55 // pred_check_branch
          %1117 = sbr.rel (%p1115) target = $region60
        $region59: #{bottleneck_forward.1} parent=55 // pred_region
          %s1118 = sand.u32 %s182, 1
          %s1119 = scalar_lea.sflag [#allocation4], %s1118
          %s1120 = sand.u32 %s182, 1
          %s1121 = smul.addr %s1120, 64
          %s1122 = scalar_lea.vmem [#allocation3], %s1121
          %1123 = dma.done %s1119, 1024
        $region60: #{bottleneck_forward.1} parent=55 // pred_fallthru
          _
      $region56: #{bottleneck_forward.1} parent=5 // pred_fallthru
        _
    $region6: #{bottleneck_forward.1} parent=1 // loop_footer
      %s20 = sadd.s32 1, %s16
    $region7: #{bottleneck_forward.1} parent=1 // loop_footer_branch
      %15 = sbr.rel target = $region3
    $region8: #{bottleneck_forward.1} parent=1 // loop_exit
      _
    %1124 = vsyncpa [#allocation4], 1
    %s1125 = scalar_lea.sflag [#allocation4], 1
    %1126 = vsyncpa %s1125, 1

</llo_original>
